<compile_context>
chip_gen: v7x
topology: tpu7x:2x2x1
jax: 0.10.0
libtpu: 0.0.40
codegen_flags: <defaults>
</compile_context>

<pallas_src>
import functools

import jax
import jax.numpy as jnp
from jax.experimental import pallas as pl
from jax.experimental.pallas import tpu as pltpu


def _sigmoid_kernel(x_ref, o_ref, *, exact):
    # Elementwise sigmoid on the whole VMEM tile; compute in f32 in-vreg.
    x = x_ref[...]
    xf = x.astype(jnp.float32)
    denom = 1.0 + jnp.exp(-xf)          # exp -> EUP slot
    if exact:
        y = 1.0 / denom                 # exact VPU divide (f32 I/O, mem-bound)
    else:
        y = pl.reciprocal(denom, approx=True)   # EUP vrcp; fine for bf16/fp8 out
    o_ref[...] = y.astype(o_ref.dtype)


def _device_tile_params():
    """(target tile bytes, vmem_limit_bytes or None) per TPU generation."""
    try:
        kind = jax.devices()[0].device_kind.lower()
    except Exception:
        kind = ""
    if "v6" in kind:
        # v6e: 128 MiB VMEM; 4 x 6 MiB double-buffered tiles = 24 MiB resident.
        return 6 << 20, 48 << 20
    if "v7" in kind or "7x" in kind:
        # v7x: only 64 MiB VMEM per TC; keep resident VMEM well under that.
        return 4 << 20, 40 << 20
    # v5e / unknown: 4 x 2 MiB = 8 MiB fits the 16 MiB default scoped VMEM.
    return 2 << 20, None


def _sigmoid_slab(slab):
    """Run the Pallas sigmoid over a lane-dense 2-D (rows, width) slab."""
    rows, width = slab.shape
    dtype = slab.dtype
    itemsize = jnp.dtype(dtype).itemsize
    exact = itemsize >= 4               # keep exact divide for f32

    tile_bytes, vmem_limit = _device_tile_params()

    # Sublane packing per dtype: 8 rows/vreg f32, 16 bf16, 32 int8/fp8.
    sub = max(8, 32 // itemsize)
    target_rows = max(sub, tile_bytes // (width * itemsize))
    if target_rows >= rows:
        block_rows = rows               # full sublane extent: always legal
    else:
        block_rows = max(sub, (target_rows // sub) * sub)

    grid = (pl.cdiv(rows, block_rows),)  # partial last block masked by Pallas

    cp_kwargs = dict(dimension_semantics=("parallel",))
    if vmem_limit is not None:
        cp_kwargs["vmem_limit_bytes"] = vmem_limit

    return pl.pallas_call(
        functools.partial(_sigmoid_kernel, exact=exact),
        out_shape=jax.ShapeDtypeStruct((rows, width), dtype),
        grid_spec=pltpu.PrefetchScalarGridSpec(
            num_scalar_prefetch=0,
            grid=grid,
            in_specs=[pl.BlockSpec((block_rows, width), lambda i: (i, 0))],
            out_specs=pl.BlockSpec((block_rows, width), lambda i: (i, 0)),
        ),
        compiler_params=pltpu.CompilerParams(**cp_kwargs),
    )(slab)


_FAST_PATH_BYTES = 256 * 1024   # below this, plain XLA sigmoid beats launch cost


def tudui_forward(x, *, force_pallas=False):
    """Equivalent of Tudui.forward: elementwise sigmoid, any-shape float array."""
    orig_shape = x.shape
    n = x.size
    if n == 0:
        return x

    nbytes = n * jnp.dtype(x.dtype).itemsize
    if not force_pallas and nbytes < _FAST_PATH_BYTES:
        return jax.nn.sigmoid(x)        # tiny-input fast path

    # Widest lane width (multiple of 128) dividing n exactly -> free reshape.
    width = None
    for w in (2048, 1024, 512, 256, 128):
        if n % w == 0:
            width = w
            break

    if width is not None:
        return _sigmoid_slab(x.reshape(-1, width)).reshape(orig_shape)

    # Ragged case: Pallas on the 128-aligned prefix, <=127-element tail in XLA.
    flat = x.reshape(-1)
    aligned = (n // 128) * 128
    if aligned == 0:
        return jax.nn.sigmoid(x)
    w = 128
    for cand in (2048, 1024, 512, 256, 128):
        if aligned % cand == 0:
            w = cand
            break
    head = _sigmoid_slab(flat[:aligned].reshape(-1, w)).reshape(-1)
    tail = jax.nn.sigmoid(flat[aligned:])
    return jnp.concatenate([head, tail]).reshape(orig_shape)


if __name__ == "__main__":
    key = jax.random.PRNGKey(0)
    k1, k2, k3, k4 = jax.random.split(key, 4)

    # 1) Aligned f32 NCHW input (CIFAR-like batch), Pallas path forced so the
    #    kernel is actually exercised despite the small size.
    x1 = jax.random.normal(k1, (2, 3, 32, 32), dtype=jnp.float32)
    y1 = jax.block_until_ready(tudui_forward(x1, force_pallas=True))
    assert y1.shape == x1.shape and y1.dtype == x1.dtype
    assert jnp.allclose(y1, jax.nn.sigmoid(x1), atol=1e-6)

    # 2) Ragged element count (315 % 128 != 0): aligned-prefix kernel + XLA tail.
    x2 = jax.random.normal(k2, (5, 7, 9), dtype=jnp.float32)
    y2 = jax.block_until_ready(tudui_forward(x2, force_pallas=True))
    assert jnp.allclose(y2, jax.nn.sigmoid(x2), atol=1e-6)

    # 3) bf16 input: exercises the EUP approx-reciprocal path.
    x3 = jax.random.normal(k3, (2, 4, 16, 16), dtype=jnp.bfloat16)
    y3 = jax.block_until_ready(tudui_forward(x3, force_pallas=True))
    assert y3.dtype == jnp.bfloat16
    assert jnp.allclose(y3.astype(jnp.float32),
                        jax.nn.sigmoid(x3.astype(jnp.float32)), atol=2e-2)

    # 4) Default path on a tiny (-1, 1, 2, 2) tensor like the module's reshape:
    #    takes the small-input fast path.
    x4 = jax.random.normal(k4, (4, 1, 2, 2), dtype=jnp.float32)
    y4 = jax.block_until_ready(tudui_forward(x4))
    assert jnp.allclose(y4, jax.nn.sigmoid(x4), atol=1e-6)

    print("KERNEL_OK")
</pallas_src>

<mosaic_0001>
module attributes {stable_mosaic.version = 11 : i64} {
  func.func @_sigmoid_kernel(%arg0: i32, %arg1: memref<3x2048xf32, #tpu.memory_space<vmem>>, %arg2: memref<3x2048xf32, #tpu.memory_space<vmem>>) attributes {dimension_semantics = [#tpu.dimension_semantics<parallel>], iteration_bounds = array<i64: 1>, scalar_prefetch = 0 : i64, scratch_operands = 0 : i64, tpu.core_type = #tpu.core_type<tc>, window_params = [{transform_indices = @transform_0, window_bounds = array<i64: 3, 2048>}, {transform_indices = @transform_1, window_bounds = array<i64: 3, 2048>}]} {
    %c0 = arith.constant 0 : index
    %c0_0 = arith.constant 0 : index
    %0 = vector.load %arg1[%c0, %c0_0] : memref<3x2048xf32, #tpu.memory_space<vmem>>, vector<3x2048xf32>
    %cst = arith.constant 0.000000e+00 : f32
    %1 = vector.broadcast %cst : f32 to vector<3x2048xf32>
    %2 = arith.subf %1, %0 : vector<3x2048xf32>
    %3 = math.exp %2 : vector<3x2048xf32>
    %cst_1 = arith.constant 1.000000e+00 : f32
    %4 = vector.broadcast %cst_1 : f32 to vector<3x2048xf32>
    %5 = arith.addf %4, %3 : vector<3x2048xf32>
    %cst_2 = arith.constant 1.000000e+00 : f32
    %6 = vector.broadcast %cst_2 : f32 to vector<3x2048xf32>
    %7 = arith.divf %6, %5 : vector<3x2048xf32>
    %c0_3 = arith.constant 0 : index
    %c0_4 = arith.constant 0 : index
    %8 = vector.load %arg2[%c0_3, %c0_4] : memref<3x2048xf32, #tpu.memory_space<vmem>>, vector<3x2048xf32>
    tpu.vector_store %arg2[%c0_3, %c0_4], %7 {strides = array<i32>} : memref<3x2048xf32, #tpu.memory_space<vmem>>, vector<3x2048xf32>,
    return
  }
  func.func @transform_0(%arg0: i32) -> (i32, i32) {
    %c0_i32 = arith.constant 0 : i32
    %c0_i32_0 = arith.constant 0 : i32
    return %arg0, %c0_i32 : i32, i32
  }
  func.func @transform_1(%arg0: i32) -> (i32, i32) {
    %c0_i32 = arith.constant 0 : i32
    %c0_i32_0 = arith.constant 0 : i32
    return %arg0, %c0_i32 : i32, i32
  }
}

</mosaic_0001>

<llo_original>
// kernel: tpu_custom_call.1
$region0: #{tpu_custom_call.1}
  #allocation0 [shape = 'u32[]', space=smem, size = 0x4, offset = 0x4, fixed_abs, tag = 'smem constant byte address 0x4 - core index']
  #allocation1 [shape = 'u32[144,128]{1,0:T(1,128)}', space=vmem, size = 0x12000, scoped, tag = 'internal scratch']
  %s0 = inlined_call_operand.hbm [shape: f32[3,2048], index: 0, kind: input, shape index: {}]
  %s1 = inlined_call_operand.hbm [shape: f32[3,2048], index: 1, kind: output, shape index: {}]
  %s2 = sld [smem:[#allocation0]]
  $region18: #{tpu_custom_call.1} parent=0
    _
  %s4 = ssub.s32 1, %s2
  %s5 = scalar_select 0, %s4, %s2
  $region1: #{tpu_custom_call.1} parent=0
    #allocation2 [shape = 'u8[32768]{0}', space=vmem, size = 0x8000, scoped, tag = 'input window, operand 0, single buffered']
    #allocation3 [shape = 's32[1]{0}', space=sflag, size = 0x4, scoped, tag = 'scoped memory for tpu_custom_call.1']
    #allocation4 [shape = 's32[1]{0}', space=sflag, size = 0x4, scoped, tag = 'scoped memory for tpu_custom_call.1']
    #allocation5 [shape = 'u8[32768]{0}', space=vmem, size = 0x8000, scoped, tag = 'output window, operand 0, single buffered']
    %6 = vsyncpa [#allocation3], 0
    %7 = vsyncpa [#allocation4], 0
    // Predicated region
    $region2: #{tpu_custom_call.1} parent=1 // pred_check
      _
    $region3: #{tpu_custom_call.1} parent=1 // pred_check_branch
      %9 = sbr.rel (0) target = $region5
    $region4: #{tpu_custom_call.1} parent=1 // pred_region
      %s11 = ssub.s32 1024, 1024
      %12 = vsyncadd [#allocation3], %s11
      %s14 = sshll.u32 [#allocation2], 4
      %s15 = int_to_ptr.vmem [resolvable:$true] %s14
      %17 = dma.hbm_to_vmem [thread:$0]  %s0, 1024, %s15, [#allocation3]
    $region5: #{tpu_custom_call.1} parent=1 // pred_fallthru
      _
    // Predicated region
    $region6: #{tpu_custom_call.1} parent=1 // pred_check
      _
    $region7: #{tpu_custom_call.1} parent=1 // pred_check_branch
      %19 = sbr.rel (0) target = $region9
    $region8: #{tpu_custom_call.1} parent=1 // pred_region
      %20 = dma.done [#allocation3], 1024
    $region9: #{tpu_custom_call.1} parent=1 // pred_fallthru
      _
    %v21 = vld [vmem:[#allocation2] sm:$0x77]
    %v22 = vld [vmem:[#allocation2 + $0x8] sm:$0x77]
    %v23 = vld [vmem:[#allocation2 + $0x10] sm:$0x77]
    %v24 = vld [vmem:[#allocation2 + $0x18] sm:$0x77]
    %v25 = vld [vmem:[#allocation2 + $0x20] sm:$0x77]
    %v26 = vld [vmem:[#allocation2 + $0x28] sm:$0x77]
    %v27 = vld [vmem:[#allocation2 + $0x30] sm:$0x77]
    %v28 = vld [vmem:[#allocation2 + $0x38] sm:$0x77]
    %v29 = vsub.f32 0.0, %v21
    %v30 = vsub.f32 0.0, %v22
    %v31 = vsub.f32 0.0, %v23
    %v32 = vsub.f32 0.0, %v24
    %v33 = vsub.f32 0.0, %v25
    %v34 = vsub.f32 0.0, %v26
    %v35 = vsub.f32 0.0, %v27
    %v36 = vsub.f32 0.0, %v28
    %v37 = vmul.f32 %v29, 1.442695
    %v38 = vpow.pop %v37
    %v39 = vmul.f32 %v30, 1.442695
    %v40 = vpow.pop %v39
    %v41 = vmul.f32 %v31, 1.442695
    %v42 = vpow.pop %v41
    %v43 = vmul.f32 %v32, 1.442695
    %v44 = vpow.pop %v43
    %v45 = vmul.f32 %v33, 1.442695
    %v46 = vpow.pop %v45
    %v47 = vmul.f32 %v34, 1.442695
    %v48 = vpow.pop %v47
    %v49 = vmul.f32 %v35, 1.442695
    %v50 = vpow.pop %v49
    %v51 = vmul.f32 %v36, 1.442695
    %v52 = vpow.pop %v51
    %v53 = vadd.f32 %v38, 1.0
    %v54 = vadd.f32 %v40, 1.0
    %v55 = vadd.f32 %v42, 1.0
    %v56 = vadd.f32 %v44, 1.0
    %v57 = vadd.f32 %v46, 1.0
    %v58 = vadd.f32 %v48, 1.0
    %v59 = vadd.f32 %v50, 1.0
    %v60 = vadd.f32 %v52, 1.0
    %v61 = vrcp.pop %v53
    %v62 = vmul.f32 1.0, %v61
    %v63 = vrcp.pop %v54
    %v64 = vmul.f32 1.0, %v63
    %v65 = vrcp.pop %v55
    %v66 = vmul.f32 1.0, %v65
    %v67 = vrcp.pop %v56
    %v68 = vmul.f32 1.0, %v67
    %v69 = vrcp.pop %v57
    %v70 = vmul.f32 1.0, %v69
    %v71 = vrcp.pop %v58
    %v72 = vmul.f32 1.0, %v71
    %v73 = vrcp.pop %v59
    %v74 = vmul.f32 1.0, %v73
    %v75 = vrcp.pop %v60
    %v76 = vmul.f32 1.0, %v75
    %77 = vst [vmem:[#allocation5] sm:$0x77] %v62
    %78 = vst [vmem:[#allocation5 + $0x8] sm:$0x77] %v64
    %79 = vst [vmem:[#allocation5 + $0x10] sm:$0x77] %v66
    %80 = vst [vmem:[#allocation5 + $0x18] sm:$0x77] %v68
    %81 = vst [vmem:[#allocation5 + $0x20] sm:$0x77] %v70
    %82 = vst [vmem:[#allocation5 + $0x28] sm:$0x77] %v72
    %83 = vst [vmem:[#allocation5 + $0x30] sm:$0x77] %v74
    %84 = vst [vmem:[#allocation5 + $0x38] sm:$0x77] %v76
    // Predicated region
    $region10: #{tpu_custom_call.1} parent=1 // pred_check
      _
    $region11: #{tpu_custom_call.1} parent=1 // pred_check_branch
      %86 = sbr.rel (0) target = $region13
    $region12: #{tpu_custom_call.1} parent=1 // pred_region
      %s88 = ssub.s32 1024, 1024
      %89 = vsyncadd [#allocation4], %s88
      %s91 = sshll.u32 [#allocation5], 4
      %s92 = int_to_ptr.vmem [resolvable:$true] %s91
      %94 = dma.vmem_to_hbm [thread:$0]  %s92, 1024, %s1, [#allocation4]
    $region13: #{tpu_custom_call.1} parent=1 // pred_fallthru
      _
    // Predicated region
    $region14: #{tpu_custom_call.1} parent=1 // pred_check
      _
    $region15: #{tpu_custom_call.1} parent=1 // pred_check_branch
      %96 = sbr.rel (0) target = $region17
    $region16: #{tpu_custom_call.1} parent=1 // pred_region
      %97 = dma.done [#allocation4], 1024
    $region17: #{tpu_custom_call.1} parent=1 // pred_fallthru
      _
    %98 = vsyncpa [#allocation3], 1
    %99 = vsyncpa [#allocation4], 1

</llo_original>
